<compile_context>
chip_gen: v5e
topology: v5e:2x2
jax: 0.10.0
libtpu: 0.0.40
codegen_flags: <defaults>
</compile_context>

<pallas_src>
import functools

import jax
import jax.numpy as jnp
from jax.experimental import pallas as pl
from jax.experimental.pallas import tpu as pltpu

_MAX_TN = 8192  # max lane tile along the flattened H*W axis (multiple of 128)


def _laplacian_kernel(pred_ref, gt_ref, conf_ref, sum_ref, cnt_ref,
                      acc_sum, acc_cnt, *, hw, tn):
    i = pl.program_id(1)  # tile index along the flattened pixel axis

    @pl.when(i == 0)
    def _():
        acc_sum[...] = jnp.zeros_like(acc_sum)
        acc_cnt[...] = jnp.zeros_like(acc_cnt)

    pred = pred_ref[...].astype(jnp.float32)   # (C, TN)
    gt = gt_ref[...].astype(jnp.float32)       # (C, TN)
    conf = conf_ref[...].astype(jnp.float32)   # (1, TN)

    # sum over channels of |gt - pred|
    absdiff = jnp.sum(jnp.abs(gt - pred), axis=0, keepdims=True)   # (1, TN)

    # mask = isfinite(gt)[:, 0, :, :]  (only channel 0, matching PyTorch semantics).
    # NOTE: non-finite values in channels > 0 propagate into the sum un-masked,
    # exactly as in the reference implementation.
    mask = jnp.isfinite(gt[0:1, :])                                # (1, TN) bool

    # Mask out the out-of-range tail of the last tile (instead of padding in HBM).
    if hw % tn != 0:
        lane = jax.lax.broadcasted_iota(jnp.int32, (1, tn), 1)
        mask = jnp.logical_and(mask, (i * tn + lane) < hw)

    # |gt - pred|.sum(1) / exp(conf) + conf
    val = absdiff * jnp.exp(-conf) + conf

    # Per-lane partial accumulation (no cross-lane reduce in the steady state).
    acc_sum[...] += jnp.where(mask, val, 0.0)
    acc_cnt[...] += mask.astype(jnp.float32)

    # Epilogue: one cross-lane reduce per batch, written to this batch's output slot.
    @pl.when(i == pl.num_programs(1) - 1)
    def _():
        sum_ref[...] = jnp.sum(acc_sum[...]).reshape(1, 1)
        cnt_ref[...] = jnp.sum(acc_cnt[...]).reshape(1, 1)


def laplacian_loss(predictions, gt, conf, max_gtnorm=None, max_tn=_MAX_TN):
    """Pallas implementation of LaplacianLoss.forward (max_gtnorm=None path)."""
    # TODO(synk): max_gtnorm thresholding path (unused by default in the module).
    assert max_gtnorm is None
    B, C, H, W = gt.shape
    HW = H * W

    # Free reshapes only -- no transpose, no pad, no dtype change in the wrapper.
    pred3 = predictions.reshape(B, C, HW)
    gt3 = gt.reshape(B, C, HW)
    conf3 = conf.reshape(B, 1, HW)

    # Lane tile: whole row if it fits, otherwise a large multiple of 128 with the
    # tail tile masked in-kernel.
    if HW <= max_tn:
        TN = HW
    else:
        TN = max_tn
    n_tiles = (HW + TN - 1) // TN
    grid = (B, n_tiles)

    kernel = functools.partial(_laplacian_kernel, hw=HW, tn=TN)

    sum_out, cnt_out = pl.pallas_call(
        kernel,
        out_shape=(
            jax.ShapeDtypeStruct((B, 1, 1), jnp.float32),
            jax.ShapeDtypeStruct((B, 1, 1), jnp.float32),
        ),
        grid_spec=pltpu.PrefetchScalarGridSpec(
            num_scalar_prefetch=0,
            grid=grid,
            in_specs=[
                pl.BlockSpec((pl.Squeezed(), C, TN), lambda b, i: (b, 0, i)),
                pl.BlockSpec((pl.Squeezed(), C, TN), lambda b, i: (b, 0, i)),
                pl.BlockSpec((pl.Squeezed(), 1, TN), lambda b, i: (b, 0, i)),
            ],
            out_specs=(
                pl.BlockSpec((pl.Squeezed(), 1, 1), lambda b, i: (b, 0, 0)),
                pl.BlockSpec((pl.Squeezed(), 1, 1), lambda b, i: (b, 0, 0)),
            ),
            scratch_shapes=[
                pltpu.VMEM((1, TN), jnp.float32),  # per-lane partial sums
                pltpu.VMEM((1, TN), jnp.float32),  # per-lane partial counts
            ],
        ),
        compiler_params=pltpu.CompilerParams(
            # batch axis parallel (engages both TensorCores on v7x, harmless on
            # v5e/v6e), pixel-tile reduction axis arbitrary.
            dimension_semantics=("parallel", "arbitrary"),
        ),
    )(pred3, gt3, conf3)

    total_sum = jnp.sum(sum_out)
    total_cnt = jnp.sum(cnt_out)
    # .mean() over the boolean-masked entries (cnt == 0 -> NaN, same as reference).
    return (total_sum / total_cnt).astype(predictions.dtype)


def _reference_loss(predictions, gt, conf):
    mask = jnp.isfinite(gt)[:, 0, :, :]
    absdiff = jnp.abs(gt - predictions).sum(axis=1)
    c = conf[:, 0, :, :]
    vals = absdiff / jnp.exp(c) + c
    return jnp.sum(jnp.where(mask, vals, 0.0)) / jnp.sum(mask)


def _make_inputs(key, B, C, H, W):
    k1, k2, k3 = jax.random.split(key, 3)
    predictions = jax.random.normal(k1, (B, C, H, W), dtype=jnp.float32)
    gt = jax.random.normal(k2, (B, C, H, W), dtype=jnp.float32)
    conf = 0.1 * jax.random.normal(k3, (B, 1, H, W), dtype=jnp.float32)
    # Inject non-finite values into gt channel 0 to exercise the mask.
    gt = gt.at[0, 0, 0, 0].set(jnp.nan)
    gt = gt.at[1, 0, 3, 7].set(jnp.inf)
    return predictions, gt, conf


if __name__ == "__main__":
    key = jax.random.PRNGKey(0)
    k_a, k_b = jax.random.split(key)

    # Case 1: nominal small shapes, single full-row tile per batch.
    pred, gt, conf = _make_inputs(k_a, 2, 4, 16, 16)
    loss = jax.block_until_ready(laplacian_loss(pred, gt, conf))
    ref = jax.block_until_ready(_reference_loss(pred, gt, conf))
    assert jnp.isfinite(loss), f"non-finite loss: {loss}"
    assert jnp.allclose(loss, ref, rtol=1e-5, atol=1e-5), f"mismatch: {loss} vs {ref}"

    # Case 2: non-divisible H*W with a small forced tile to exercise the
    # multi-tile path and the in-kernel tail masking.
    pred2, gt2, conf2 = _make_inputs(k_b, 2, 4, 16, 18)
    loss2 = jax.block_until_ready(laplacian_loss(pred2, gt2, conf2, max_tn=128))
    ref2 = jax.block_until_ready(_reference_loss(pred2, gt2, conf2))
    assert jnp.isfinite(loss2), f"non-finite loss: {loss2}"
    assert jnp.allclose(loss2, ref2, rtol=1e-5, atol=1e-5), f"mismatch: {loss2} vs {ref2}"

    print("KERNEL_OK")
</pallas_src>

<mosaic_0001>
module attributes {stable_mosaic.version = 11 : i64} {
  func.func @_laplacian_kernel(%arg0: i32, %arg1: i32, %arg2: memref<1x4x256xf32, #tpu.memory_space<vmem>>, %arg3: memref<1x4x256xf32, #tpu.memory_space<vmem>>, %arg4: memref<1x1x256xf32, #tpu.memory_space<vmem>>, %arg5: memref<1x1x1xf32, #tpu.memory_space<vmem>>, %arg6: memref<1x1x1xf32, #tpu.memory_space<vmem>>, %arg7: memref<1x256xf32, #tpu.memory_space<vmem>>, %arg8: memref<1x256xf32, #tpu.memory_space<vmem>>) attributes {dimension_semantics = [#tpu.dimension_semantics<parallel>, #tpu.dimension_semantics<arbitrary>], iteration_bounds = array<i64: 2, 1>, scalar_prefetch = 0 : i64, scratch_operands = 2 : i64, tpu.core_type = #tpu.core_type<tc>, window_params = [{transform_indices = @transform_0, window_bounds = array<i64: 1, 4, 256>}, {transform_indices = @transform_1, window_bounds = array<i64: 1, 4, 256>}, {transform_indices = @transform_2, window_bounds = array<i64: 1, 1, 256>}, {transform_indices = @transform_3, window_bounds = array<i64: 1, 1, 1>}, {transform_indices = @transform_4, window_bounds = array<i64: 1, 1, 1>}]} {
    %c0_i32 = arith.constant 0 : i32
    %0 = arith.cmpi eq, %arg1, %c0_i32 : i32
    %1 = arith.extui %0 : i1 to i32
    %c0_i32_0 = arith.constant 0 : i32
    %2 = arith.cmpi ne, %1, %c0_i32_0 : i32
    scf.if %2 {
      %cst_22 = arith.constant 0.000000e+00 : f32
      %34 = vector.broadcast %cst_22 : f32 to vector<1x256xf32>
      %c0_23 = arith.constant 0 : index
      %c0_24 = arith.constant 0 : index
      %35 = vector.load %arg7[%c0_23, %c0_24] : memref<1x256xf32, #tpu.memory_space<vmem>>, vector<1x256xf32>
      tpu.vector_store %arg7[%c0_23, %c0_24], %34 {strides = array<i32>} : memref<1x256xf32, #tpu.memory_space<vmem>>, vector<1x256xf32>,
      %cst_25 = arith.constant 0.000000e+00 : f32
      %36 = vector.broadcast %cst_25 : f32 to vector<1x256xf32>
      %c0_26 = arith.constant 0 : index
      %c0_27 = arith.constant 0 : index
      %37 = vector.load %arg8[%c0_26, %c0_27] : memref<1x256xf32, #tpu.memory_space<vmem>>, vector<1x256xf32>
      tpu.vector_store %arg8[%c0_26, %c0_27], %36 {strides = array<i32>} : memref<1x256xf32, #tpu.memory_space<vmem>>, vector<1x256xf32>,
    } else {
    }
    %c0 = arith.constant 0 : index
    %c0_1 = arith.constant 0 : index
    %c0_2 = arith.constant 0 : index
    %3 = vector.load %arg2[%c0, %c0_1, %c0_2] : memref<1x4x256xf32, #tpu.memory_space<vmem>>, vector<1x4x256xf32>
    %4 = vector.shape_cast %3 : vector<1x4x256xf32> to vector<4x256xf32>
    %c0_3 = arith.constant 0 : index
    %c0_4 = arith.constant 0 : index
    %c0_5 = arith.constant 0 : index
    %5 = vector.load %arg3[%c0_3, %c0_4, %c0_5] : memref<1x4x256xf32, #tpu.memory_space<vmem>>, vector<1x4x256xf32>
    %6 = vector.shape_cast %5 : vector<1x4x256xf32> to vector<4x256xf32>
    %c0_6 = arith.constant 0 : index
    %c0_7 = arith.constant 0 : index
    %c0_8 = arith.constant 0 : index
    %7 = vector.load %arg4[%c0_6, %c0_7, %c0_8] : memref<1x1x256xf32, #tpu.memory_space<vmem>>, vector<1x1x256xf32>
    %8 = vector.shape_cast %7 : vector<1x1x256xf32> to vector<1x256xf32>
    %9 = arith.subf %6, %4 : vector<4x256xf32>
    %10 = math.absf %9 : vector<4x256xf32>
    %cst = arith.constant dense<0.000000e+00> : vector<256xf32>
    %11 = vector.multi_reduction <add>, %10, %cst [0] : vector<4x256xf32> to vector<256xf32>
    %12 = vector.shape_cast %11 : vector<256xf32> to vector<1x256xf32>
    %13 = vector.extract_strided_slice %6 {offsets = [0, 0], sizes = [1, 256], strides = [1, 1]} : vector<4x256xf32> to vector<1x256xf32>
    %14 = tpu.weird %13 : vector<1x256xf32> -> vector<1x256xi1>
    %cst_9 = arith.constant dense<true> : vector<1x256xi1>
    %15 = arith.xori %14, %cst_9 : vector<1x256xi1>
    %cst_10 = arith.constant 0.000000e+00 : f32
    %16 = vector.broadcast %cst_10 : f32 to vector<1x256xf32>
    %17 = arith.subf %16, %8 : vector<1x256xf32>
    %18 = math.exp %17 : vector<1x256xf32>
    %19 = arith.mulf %12, %18 : vector<1x256xf32>
    %20 = arith.addf %19, %8 : vector<1x256xf32>
    %c0_11 = arith.constant 0 : index
    %c0_12 = arith.constant 0 : index
    %21 = vector.load %arg7[%c0_11, %c0_12] : memref<1x256xf32, #tpu.memory_space<vmem>>, vector<1x256xf32>
    %cst_13 = arith.constant 0.000000e+00 : f32
    %22 = vector.broadcast %cst_13 : f32 to vector<1x256xf32>
    %23 = arith.select %15, %20, %22 : vector<1x256xi1>, vector<1x256xf32>
    %24 = arith.addf %21, %23 : vector<1x256xf32>
    %c0_14 = arith.constant 0 : index
    %c0_15 = arith.constant 0 : index
    %25 = vector.load %arg7[%c0_14, %c0_15] : memref<1x256xf32, #tpu.memory_space<vmem>>, vector<1x256xf32>
    tpu.vector_store %arg7[%c0_14, %c0_15], %24 {strides = array<i32>} : memref<1x256xf32, #tpu.memory_space<vmem>>, vector<1x256xf32>,
    %c0_16 = arith.constant 0 : index
    %c0_17 = arith.constant 0 : index
    %26 = vector.load %arg8[%c0_16, %c0_17] : memref<1x256xf32, #tpu.memory_space<vmem>>, vector<1x256xf32>
    %27 = arith.extui %15 : vector<1x256xi1> to vector<1x256xi32>
    %28 = arith.sitofp %27 : vector<1x256xi32> to vector<1x256xf32>
    %29 = arith.addf %26, %28 : vector<1x256xf32>
    %c0_18 = arith.constant 0 : index
    %c0_19 = arith.constant 0 : index
    %30 = vector.load %arg8[%c0_18, %c0_19] : memref<1x256xf32, #tpu.memory_space<vmem>>, vector<1x256xf32>
    tpu.vector_store %arg8[%c0_18, %c0_19], %29 {strides = array<i32>} : memref<1x256xf32, #tpu.memory_space<vmem>>, vector<1x256xf32>,
    %c0_i32_20 = arith.constant 0 : i32
    %31 = arith.cmpi eq, %arg1, %c0_i32_20 : i32
    %32 = arith.extui %31 : i1 to i32
    %c0_i32_21 = arith.constant 0 : i32
    %33 = arith.cmpi ne, %32, %c0_i32_21 : i32
    scf.if %33 {
      %c0_22 = arith.constant 0 : index
      %c0_23 = arith.constant 0 : index
      %34 = vector.load %arg7[%c0_22, %c0_23] : memref<1x256xf32, #tpu.memory_space<vmem>>, vector<1x256xf32>
      %35 = vector.shape_cast %34 : vector<1x256xf32> to vector<1x1x256xf32>
      %cst_24 = arith.constant dense<0.000000e+00> : vector<1xf32>
      %36 = vector.multi_reduction <add>, %35, %cst_24 [1, 2] : vector<1x1x256xf32> to vector<1xf32>
      %37 = vector.shape_cast %36 : vector<1xf32> to vector<1x1x1xf32>
      %38 = vector.extract %37[0, 0, 0] : f32 from vector<1x1x1xf32>
      %39 = vector.broadcast %38 : f32 to vector<1x1xf32>
      %c0_25 = arith.constant 0 : index
      %c0_26 = arith.constant 0 : index
      %c0_27 = arith.constant 0 : index
      %40 = vector.load %arg5[%c0_25, %c0_26, %c0_27] : memref<1x1x1xf32, #tpu.memory_space<vmem>>, vector<1x1x1xf32>
      %41 = vector.shape_cast %40 : vector<1x1x1xf32> to vector<1x1xf32>
      %42 = vector.shape_cast %39 : vector<1x1xf32> to vector<1x1x1xf32>
      tpu.vector_store %arg5[%c0_25, %c0_26, %c0_27], %42 {strides = array<i32>} : memref<1x1x1xf32, #tpu.memory_space<vmem>>, vector<1x1x1xf32>,
      %c0_28 = arith.constant 0 : index
      %c0_29 = arith.constant 0 : index
      %43 = vector.load %arg8[%c0_28, %c0_29] : memref<1x256xf32, #tpu.memory_space<vmem>>, vector<1x256xf32>
      %44 = vector.shape_cast %43 : vector<1x256xf32> to vector<1x1x256xf32>
      %cst_30 = arith.constant dense<0.000000e+00> : vector<1xf32>
      %45 = vector.multi_reduction <add>, %44, %cst_30 [1, 2] : vector<1x1x256xf32> to vector<1xf32>
      %46 = vector.shape_cast %45 : vector<1xf32> to vector<1x1x1xf32>
      %47 = vector.extract %46[0, 0, 0] : f32 from vector<1x1x1xf32>
      %48 = vector.broadcast %47 : f32 to vector<1x1xf32>
      %c0_31 = arith.constant 0 : index
      %c0_32 = arith.constant 0 : index
      %c0_33 = arith.constant 0 : index
      %49 = vector.load %arg6[%c0_31, %c0_32, %c0_33] : memref<1x1x1xf32, #tpu.memory_space<vmem>>, vector<1x1x1xf32>
      %50 = vector.shape_cast %49 : vector<1x1x1xf32> to vector<1x1xf32>
      %51 = vector.shape_cast %48 : vector<1x1xf32> to vector<1x1x1xf32>
      tpu.vector_store %arg6[%c0_31, %c0_32, %c0_33], %51 {strides = array<i32>} : memref<1x1x1xf32, #tpu.memory_space<vmem>>, vector<1x1x1xf32>,
    } else {
    }
    return
  }
  func.func @transform_0(%arg0: i32, %arg1: i32) -> (i32, i32, i32) {
    %c0_i32 = arith.constant 0 : i32
    %c0_i32_0 = arith.constant 0 : i32
    return %arg0, %c0_i32, %arg1 : i32, i32, i32
  }
  func.func @transform_1(%arg0: i32, %arg1: i32) -> (i32, i32, i32) {
    %c0_i32 = arith.constant 0 : i32
    %c0_i32_0 = arith.constant 0 : i32
    return %arg0, %c0_i32, %arg1 : i32, i32, i32
  }
  func.func @transform_2(%arg0: i32, %arg1: i32) -> (i32, i32, i32) {
    %c0_i32 = arith.constant 0 : i32
    %c0_i32_0 = arith.constant 0 : i32
    return %arg0, %c0_i32, %arg1 : i32, i32, i32
  }
  func.func @transform_3(%arg0: i32, %arg1: i32) -> (i32, i32, i32) {
    %c0_i32 = arith.constant 0 : i32
    %c0_i32_0 = arith.constant 0 : i32
    %c0_i32_1 = arith.constant 0 : i32
    return %arg0, %c0_i32, %c0_i32_0 : i32, i32, i32
  }
  func.func @transform_4(%arg0: i32, %arg1: i32) -> (i32, i32, i32) {
    %c0_i32 = arith.constant 0 : i32
    %c0_i32_0 = arith.constant 0 : i32
    %c0_i32_1 = arith.constant 0 : i32
    return %arg0, %c0_i32, %c0_i32_0 : i32, i32, i32
  }
}

</mosaic_0001>

<llo_original>
// kernel: tpu_custom_call.1
$region0: #{tpu_custom_call.1}
  #allocation0 [shape = 'u32[]', space=smem, size = 0x4, offset = 0x4, fixed_abs, tag = 'smem constant byte address 0x4 - core index']
  #allocation1 [shape = 'u32[72,128]{1,0:T(1,128)}', space=vmem, size = 0x9000, scoped, tag = 'internal scratch']
  #allocation2 [shape = 'f32[1,256]{1,0:T(1,128)}', space=vmem, size = 0x400, scoped, tag = 'scratch operand']
  #allocation3 [shape = 'f32[1,256]{1,0:T(1,128)}', space=vmem, size = 0x400, scoped, tag = 'scratch operand']
  %s0 = inlined_call_operand.hbm [shape: f32[2,4,256], index: 0, kind: input, shape index: {}]
  %s1 = inlined_call_operand.hbm [shape: f32[2,4,256], index: 1, kind: input, shape index: {}]
  %s2 = inlined_call_operand.hbm [shape: f32[2,1,256], index: 2, kind: input, shape index: {}]
  %s3 = inlined_call_operand.vmem [shape: f32[2,1,1], index: 3, kind: output, shape index: {0}]
  %s4 = inlined_call_operand.vmem [shape: f32[2,1,1], index: 4, kind: output, shape index: {1}]
  %5 = xla_tuple %s3, %s4
  %s6 = sld [smem:[#allocation0]]
  $region73: #{tpu_custom_call.1} parent=0
    _
  %s8 = ssub.s32 1, %s6
  %s9 = scalar_select 0, %s8, %s6
  $region1: #{tpu_custom_call.1} parent=0
    #allocation4 [shape = 'u8[8192]{0}', space=vmem, size = 0x2000, scoped, tag = 'input window, operand 0']
    #allocation5 [shape = 's32[2]{0}', space=sflag, size = 0x8, scoped, tag = 'scoped memory for tpu_custom_call.1']
    #allocation6 [shape = 'u8[8192]{0}', space=vmem, size = 0x2000, scoped, tag = 'input window, operand 1']
    #allocation7 [shape = 's32[2]{0}', space=sflag, size = 0x8, scoped, tag = 'scoped memory for tpu_custom_call.1']
    #allocation8 [shape = 'u8[2048]{0}', space=vmem, size = 0x800, scoped, tag = 'input window, operand 2']
    %10 = vsyncpa [#allocation5], 0
    %s11 = scalar_lea.sflag [#allocation5], 1
    %12 = vsyncpa %s11, 0
    %13 = vsyncpa [#allocation7], 0
    %s14 = scalar_lea.sflag [#allocation7], 1
    %15 = vsyncpa %s14, 0
    loop: start=0, step=1, limit=4
    $region2: #{tpu_custom_call.1} parent=1 // loop_pre_header
      _
    $region3: #{tpu_custom_call.1} parent=1 // loop_header
      %s17 = sphi 0, %s21
      %p18 = scmp.ge.s32.totalorder %s17, 4
      %s24 = sphi 0, %s36
      %s25 = sphi 0, %s32
      %s26 = sphi 0, %s24
      %s27 = sphi 0, %s25
      %s28 = sphi 0, %s26
      %s29 = sphi 0, %s27
      %s41 = sphi 0, %s43
      %s44 = sphi 0, %s41
      %s45 = sphi 0, %s44
      %s61 = sphi 0, %s45
      %s69 = sphi 0, %s71
      %s72 = sphi 0, %s69
      %s73 = sphi 0, %s72
      %s89 = sphi 0, %s73
      %s97 = sphi 0, %s99
      %s100 = sphi 0, %s97
      %s101 = sphi 0, %s100
      %s117 = sphi 0, %s101
      %s123 = sphi 0, %s125
      %s126 = sphi 0, %s123
      %s127 = sphi 0, %s126
      %s143 = sphi 0, %s127
      %s149 = sphi 0, %s151
      %s152 = sphi 0, %s149
      %s153 = sphi 0, %s152
      %s169 = sphi 0, %s153
    $region4: #{tpu_custom_call.1} parent=1 // loop_header_branch
      %20 = sbr.rel (%p18) target = $region8
    $region5: #{tpu_custom_call.1} parent=1 // loop_body
      %s22 = ssub.s32 %s17, 1
      %s23 = ssub.s32 %s17, 2
      %s30 = sadd.s32 1, %s25
      %p31 = scmp.ge.s32.totalorder %s30, 1
      %s32 = scalar_select %p31, 0, %s30
      %s33 = sadd.s32 1, %s24
      %s34 = scalar_select %p31, %s33, %s24
      %p35 = scmp.ge.s32.totalorder %s34, 2
      %s36 = scalar_select %p35, 0, %s34
      %s37 = ssub.s32 %s24, %s36
      %s38 = ssub.s32 %s25, %s32
      %s39 = sor.u32 %s37, %s38
      %p40 = scmp.eq.s32.totalorder %s39, 0
      %s42 = sadd.s32 %s41, 1
      %s43 = scalar_select %p40, %s41, %s42
      %p46 = pneg %p40
      %p47 = scmp.eq.s32.totalorder %s17, 1
      %p48 = por %p46, %p47
      %p49 = scmp.ne.s32.totalorder %s41, %s44
      %p50 = scmp.eq.s32.totalorder %s17, 0
      %p51 = por %p49, %p50
      %p52 = scmp.ne.s32.totalorder %s41, %s44
      %p53 = scmp.eq.s32.totalorder %s22, 1
      %p54 = por %p52, %p53
      %p55 = scmp.ne.s32.totalorder %s44, %s45
      %p56 = scmp.eq.s32.totalorder %s22, 0
      %p57 = por %p55, %p56
      %p58 = scmp.ne.s32.totalorder %s44, %s45
      %p59 = scmp.eq.s32.totalorder %s23, 1
      %p60 = por %p58, %p59
      %p62 = scmp.ne.s32.totalorder %s45, %s61
      %p63 = scmp.eq.s32.totalorder %s23, 0
      %p64 = por %p62, %p63
      %s65 = ssub.s32 %s24, %s36
      %s66 = ssub.s32 %s25, %s32
      %s67 = sor.u32 %s65, %s66
      %p68 = scmp.eq.s32.totalorder %s67, 0
      %s70 = sadd.s32 %s69, 1
      %s71 = scalar_select %p68, %s69, %s70
      %p74 = pneg %p68
      %p75 = scmp.eq.s32.totalorder %s17, 1
      %p76 = por %p74, %p75
      %p77 = scmp.ne.s32.totalorder %s69, %s72
      %p78 = scmp.eq.s32.totalorder %s17, 0
      %p79 = por %p77, %p78
      %p80 = scmp.ne.s32.totalorder %s69, %s72
      %p81 = scmp.eq.s32.totalorder %s22, 1
      %p82 = por %p80, %p81
      %p83 = scmp.ne.s32.totalorder %s72, %s73
      %p84 = scmp.eq.s32.totalorder %s22, 0
      %p85 = por %p83, %p84
      %p86 = scmp.ne.s32.totalorder %s72, %s73
      %p87 = scmp.eq.s32.totalorder %s23, 1
      %p88 = por %p86, %p87
      %p90 = scmp.ne.s32.totalorder %s73, %s89
      %p91 = scmp.eq.s32.totalorder %s23, 0
      %p92 = por %p90, %p91
      %s93 = ssub.s32 %s24, %s36
      %s94 = ssub.s32 %s25, %s32
      %s95 = sor.u32 %s93, %s94
      %p96 = scmp.eq.s32.totalorder %s95, 0
      %s98 = sadd.s32 %s97, 1
      %s99 = scalar_select %p96, %s97, %s98
      %p102 = pneg %p96
      %p103 = scmp.eq.s32.totalorder %s17, 1
      %p104 = por %p102, %p103
      %p105 = scmp.ne.s32.totalorder %s97, %s100
      %p106 = scmp.eq.s32.totalorder %s17, 0
      %p107 = por %p105, %p106
      %p108 = scmp.ne.s32.totalorder %s97, %s100
      %p109 = scmp.eq.s32.totalorder %s22, 1
      %p110 = por %p108, %p109
      %p111 = scmp.ne.s32.totalorder %s100, %s101
      %p112 = scmp.eq.s32.totalorder %s22, 0
      %p113 = por %p111, %p112
      %p114 = scmp.ne.s32.totalorder %s100, %s101
      %p115 = scmp.eq.s32.totalorder %s23, 1
      %p116 = por %p114, %p115
      %p118 = scmp.ne.s32.totalorder %s101, %s117
      %p119 = scmp.eq.s32.totalorder %s23, 0
      %p120 = por %p118, %p119
      %s121 = ssub.s32 %s24, %s36
      %p122 = scmp.eq.s32.totalorder %s121, 0
      %s124 = sadd.s32 %s123, 1
      %s125 = scalar_select %p122, %s123, %s124
      %p128 = pneg %p122
      %p129 = scmp.eq.s32.totalorder %s17, 1
      %p130 = por %p128, %p129
      %p131 = scmp.ne.s32.totalorder %s123, %s126
      %p132 = scmp.eq.s32.totalorder %s17, 0
      %p133 = por %p131, %p132
      %p134 = scmp.ne.s32.totalorder %s123, %s126
      %p135 = scmp.eq.s32.totalorder %s22, 1
      %p136 = por %p134, %p135
      %p137 = scmp.ne.s32.totalorder %s126, %s127
      %p138 = scmp.eq.s32.totalorder %s22, 0
      %p139 = por %p137, %p138
      %p140 = scmp.ne.s32.totalorder %s126, %s127
      %p141 = scmp.eq.s32.totalorder %s23, 1
      %p142 = por %p140, %p141
      %p144 = scmp.ne.s32.totalorder %s127, %s143
      %p145 = scmp.eq.s32.totalorder %s23, 0
      %p146 = por %p144, %p145
      %s147 = ssub.s32 %s24, %s36
      %p148 = scmp.eq.s32.totalorder %s147, 0
      %s150 = sadd.s32 %s149, 1
      %s151 = scalar_select %p148, %s149, %s150
      %p154 = pneg %p148
      %p155 = scmp.eq.s32.totalorder %s17, 1
      %p156 = por %p154, %p155
      %p157 = scmp.ne.s32.totalorder %s149, %s152
      %p158 = scmp.eq.s32.totalorder %s17, 0
      %p159 = por %p157, %p158
      %p160 = scmp.ne.s32.totalorder %s149, %s152
      %p161 = scmp.eq.s32.totalorder %s22, 1
      %p162 = por %p160, %p161
      %p163 = scmp.ne.s32.totalorder %s152, %s153
      %p164 = scmp.eq.s32.totalorder %s22, 0
      %p165 = por %p163, %p164
      %p166 = scmp.ne.s32.totalorder %s152, %s153
      %p167 = scmp.eq.s32.totalorder %s23, 1
      %p168 = por %p166, %p167
      %p170 = scmp.ne.s32.totalorder %s153, %s169
      %p171 = scmp.eq.s32.totalorder %s23, 0
      %p172 = por %p170, %p171
      %p173 = scmp.le.s32.totalorder 1, %s17
      %p174 = scmp.lt.s32.totalorder %s17, 3
      %p175 = pnand %p173, %p174
      %p176 = pneg %p175
      // Predicated region
      $region9: #{tpu_custom_call.1} parent=5 // pred_check
        _
      $region10: #{tpu_custom_call.1} parent=5 // pred_check_branch
        %178 = sbr.rel (%p175) target = $region12
      $region11: #{tpu_custom_call.1} parent=5 // pred_region
        %s179 = ssub.s32 %s17, 1
      $region12: #{tpu_custom_call.1} parent=5 // pred_fallthru
        _
      %p180 = scmp.lt.s32.totalorder %s17, 2
      // Predicated region
      $region13: #{tpu_custom_call.1} parent=5 // pred_check
        %p181 = pneg %p180
      $region14: #{tpu_custom_call.1} parent=5 // pred_check_branch
        %183 = sbr.rel (%p181) target = $region16
      $region15: #{tpu_custom_call.1} parent=5 // pred_region
        // Predicated region
        $region17: #{tpu_custom_call.1} parent=15 // pred_check
          %p184 = pneg %p51
        $region18: #{tpu_custom_call.1} parent=15 // pred_check_branch
          %186 = sbr.rel (%p184) target = $region20
        $region19: #{tpu_custom_call.1} parent=15 // pred_region
          %s187 = sand.u32 %s41, 1
          %s188 = scalar_lea.sflag [#allocation5], %s187
          %s189 = sand.u32 %s41, 1
          %s190 = smul.addr %s189, 8
          %s191 = scalar_lea.vmem [#allocation4], %s190
          %s192 = smul.u32 2, %s25
          %194 = vsyncadd %s188, 0
          %s195 = smul.addr %s24, 2
          %s196 = sadd.s32 %s192, %s195
          %s197 = smul.addr %s196, 4
          %s198 = scalar_lea.hbm %s0, %s197
          %s200 = sshll.u32 %s198, 4
          %s201 = int_to_ptr.hbm [resolvable:$true] %s200
          %s202 = sshll.u32 %s191, 4
          %s203 = int_to_ptr.vmem [resolvable:$true] %s202
          %205 = dma.hbm_to_vmem [thread:$0]  %s201, 128, %s203, %s188
        $region20: #{tpu_custom_call.1} parent=15 // pred_fallthru
          _
        // Predicated region
        $region21: #{tpu_custom_call.1} parent=15 // pred_check
          %p206 = pneg %p79
        $region22: #{tpu_custom_call.1} parent=15 // pred_check_branch
          %208 = sbr.rel (%p206) target = $region24
        $region23: #{tpu_custom_call.1} parent=15 // pred_region
          %s209 = sand.u32 %s17, 1
          %s210 = scalar_lea.sflag [#allocation7], %s209
          %s211 = sand.u32 %s69, 1
          %s212 = smul.addr %s211, 8
          %s213 = scalar_lea.vmem [#allocation6], %s212
          %s214 = smul.u32 2, %s25
          %216 = vsyncadd %s210, 0
          %s217 = smul.addr %s24, 2
          %s218 = sadd.s32 %s214, %s217
          %s219 = smul.addr %s218, 4
          %s220 = scalar_lea.hbm %s1, %s219
          %s222 = sshll.u32 %s220, 4
          %s223 = int_to_ptr.hbm [resolvable:$true] %s222
          %s224 = sshll.u32 %s213, 4
          %s225 = int_to_ptr.vmem [resolvable:$true] %s224
          %227 = dma.hbm_to_vmem [thread:$0]  %s223, 128, %s225, %s210
        $region24: #{tpu_custom_call.1} parent=15 // pred_fallthru
          _
        // Predicated region
        $region25: #{tpu_custom_call.1} parent=15 // pred_check
          %p228 = pneg %p107
        $region26: #{tpu_custom_call.1} parent=15 // pred_check_branch
          %230 = sbr.rel (%p228) target = $region28
        $region27: #{tpu_custom_call.1} parent=15 // pred_region
          %s231 = sand.u32 %s17, 1
          %s232 = scalar_lea.sflag [#allocation7], %s231
          %s233 = sand.u32 %s97, 1
          %s234 = smul.addr %s233, 2
          %s235 = scalar_lea.vmem [#allocation8], %s234
          %s236 = smul.u32 2, %s25
          %238 = vsyncadd %s232, 0
          %s239 = smul.addr %s24, 2
          %s240 = sadd.s32 %s236, %s239
          %s241 = scalar_lea.hbm %s2, %s240
          %s243 = sshll.u32 %s241, 4
          %s244 = int_to_ptr.hbm [resolvable:$true] %s243
          %s245 = sshll.u32 %s235, 4
          %s246 = int_to_ptr.vmem [resolvable:$true] %s245
          %248 = dma.hbm_to_vmem [thread:$0]  %s244, 32, %s246, %s232
        $region28: #{tpu_custom_call.1} parent=15 // pred_fallthru
          _
      $region16: #{tpu_custom_call.1} parent=5 // pred_fallthru
        _
      %p249 = scmp.le.s32.totalorder 1, %s17
      %p250 = scmp.lt.s32.totalorder %s17, 3
      %p251 = pnand %p249, %p250
      %p252 = pneg %p251
      // Predicated region
      $region29: #{tpu_custom_call.1} parent=5 // pred_check
        _
      $region30: #{tpu_custom_call.1} parent=5 // pred_check_branch
        %254 = sbr.rel (%p251) target = $region32
      $region31: #{tpu_custom_call.1} parent=5 // pred_region
        %s255 = ssub.s32 %s17, 1
        %s256 = sand.u32 %s44, 1
        %s257 = scalar_lea.sflag [#allocation5], %s256
        %s258 = sand.u32 %s44, 1
        %s259 = smul.addr %s258, 8
        %s260 = scalar_lea.vmem [#allocation4], %s259
        // Predicated region
        $region33: #{tpu_custom_call.1} parent=31 // pred_check
          %p261 = pneg %p57
        $region34: #{tpu_custom_call.1} parent=31 // pred_check_branch
          %263 = sbr.rel (%p261) target = $region36
        $region35: #{tpu_custom_call.1} parent=31 // pred_region
          %265 = dma.done %s257, 128
        $region36: #{tpu_custom_call.1} parent=31 // pred_fallthru
          _
        %s266 = sand.u32 %s22, 1
        %s267 = scalar_lea.sflag [#allocation7], %s266
        %s268 = sand.u32 %s72, 1
        %s269 = smul.addr %s268, 8
        %s270 = scalar_lea.vmem [#allocation6], %s269
        // Predicated region
        $region37: #{tpu_custom_call.1} parent=31 // pred_check
          %p271 = pneg %p85
        $region38: #{tpu_custom_call.1} parent=31 // pred_check_branch
          %273 = sbr.rel (%p271) target = $region40
        $region39: #{tpu_custom_call.1} parent=31 // pred_region
          %275 = dma.done %s267, 128
        $region40: #{tpu_custom_call.1} parent=31 // pred_fallthru
          _
        %s276 = sand.u32 %s22, 1
        %s277 = scalar_lea.sflag [#allocation7], %s276
        %s278 = sand.u32 %s100, 1
        %s279 = smul.addr %s278, 2
        %s280 = scalar_lea.vmem [#allocation8], %s279
        // Predicated region
        $region41: #{tpu_custom_call.1} parent=31 // pred_check
          %p281 = pneg %p113
        $region42: #{tpu_custom_call.1} parent=31 // pred_check_branch
          %283 = sbr.rel (%p281) target = $region44
        $region43: #{tpu_custom_call.1} parent=31 // pred_region
          %285 = dma.done %s277, 32
        $region44: #{tpu_custom_call.1} parent=31 // pred_fallthru
          _
        %s286 = sand.u32 %s44, 1
        %s287 = scalar_lea.sflag [#allocation5], %s286
        %s288 = sand.u32 %s44, 1
        %s289 = smul.addr %s288, 8
        %s290 = scalar_lea.vmem [#allocation4], %s289
        %p291 = pneg %p57
        %p292 = pneg %p54
        %s293 = sand.u32 %s22, 1
        %s294 = scalar_lea.sflag [#allocation7], %s293
        %s295 = sand.u32 %s72, 1
        %s296 = smul.addr %s295, 8
        %s297 = scalar_lea.vmem [#allocation6], %s296
        %p298 = pneg %p85
        %p299 = pneg %p82
        %s300 = sand.u32 %s22, 1
        %s301 = scalar_lea.sflag [#allocation7], %s300
        %s302 = sand.u32 %s100, 1
        %s303 = smul.addr %s302, 2
        %s304 = scalar_lea.vmem [#allocation8], %s303
        %p305 = pneg %p113
        %p306 = pneg %p110
        %p307 = pneg %p139
        %p308 = pneg %p136
        %p309 = scmp.lt.s32.totalorder %s26, 1
        %s310 = scalar_select %p309, %s26, 1
        %s311 = scalar_lea.vmem %s3, %s310
        %p312 = pneg %p165
        %p313 = pneg %p162
        %p314 = scmp.lt.s32.totalorder %s26, 1
        %s315 = scalar_select %p314, %s26, 1
        %s316 = scalar_lea.vmem %s4, %s315
        %s317 = smul.u32 2, %s27
        %s318 = smul.u32 2, %s27
        %s319 = smul.u32 2, %s27
        %p320 = scmp.lt.s32.totalorder %s26, 1
        %s321 = scalar_select %p320, %s26, 1
        %s322 = scalar_lea.vmem %s3, %s321
        %p323 = scmp.lt.s32.totalorder %s26, 1
        %s324 = scalar_select %p323, %s26, 1
        %s325 = scalar_lea.vmem %s4, %s324
        %p326 = scmp.eq.s32.totalorder %s27, 0
        // Predicated region
        $region45: #{tpu_custom_call.1} parent=31 // pred_check
          %p327 = pneg %p326
        $region46: #{tpu_custom_call.1} parent=31 // pred_check_branch
          %329 = sbr.rel (%p327) target = $region48
        $region47: #{tpu_custom_call.1} parent=31 // pred_region
          %v330 = vlaneseq
          %vm331 = vcmp.ge.s32.totalorder %v330, 0
          %vm332 = vcmp.lt.s32.totalorder %v330, 256
          %vm333 = vmand %vm331, %vm332
          %334 = vst.msk [vmem:[#allocation2] sm:$0x3] %vm333, 0.0
          %335 = vst.msk [vmem:[#allocation3] sm:$0x3] %vm333, 0.0
        $region48: #{tpu_custom_call.1} parent=31 // pred_fallthru
          _
        %v336 = vld [vmem:[%s260] sm:$0xff]
        %v337 = vld [vmem:[%s270] sm:$0xff]
        %v338 = vld [vmem:[%s280] sm:$0x3]
        %v339 = vsub.f32 %v337, %v336
        %v340 = vand.u32 2147483647, %v339
        %342 = vst [vmem:[#allocation1] ss:$2 sm:$0xff] %v340
        %v343 = vld.sshfl [vmem:[#allocation1] sm:$0xff pattern:$0x75316420]
        %v344 = vld.sshfl [vmem:[#allocation1 + $0x8] sm:$0xff pattern:$0x75316420]
        %vm347 = vcmask 1043456
        %v348 = vsel %vm347, %v343, 0.0
        %v349 = vrot.slane %v348, 4
        %v350 = vadd.f32 %v348, %v349
        %v351 = vrot.slane %v350, 2
        %v352 = vadd.f32 %v350, %v351
        %v353 = vrot.slane %v352, 1
        %v354 = vadd.f32 %v352, %v353
        %v355 = vsel %vm347, %v344, 0.0
        %v356 = vrot.slane %v355, 4
        %v357 = vadd.f32 %v355, %v356
        %v358 = vrot.slane %v357, 2
        %v359 = vadd.f32 %v357, %v358
        %v360 = vrot.slane %v359, 1
        %v361 = vadd.f32 %v359, %v360
        %vm362 = vweird.f32 %v337
        %vm363 = vmxor %vm362, 1
        %v364 = vsub.f32 0.0, %v338
        %v365 = vmul.f32 %v364, 1.442695
        %v366 = vpow.pop %v365
        %v368 = vperm.slane %v366, 0
        %v369 = vperm.slane %v366, 1
        %v372 = vmul.f32 %v354, %v368
        %v373 = vmul.f32 %v361, %v369
        %v375 = vperm.slane %v338, 0
        %v376 = vperm.slane %v338, 1
        %v379 = vadd.f32 %v372, %v375
        %v380 = vadd.f32 %v373, %v376
        %v381 = vld [vmem:[#allocation2] sm:$0x3]
        %v384 = vrot.slane %v380, 4
        %v385 = vsel %vm347, %v379, %v384
        %v387 = vsel %vm363, %v385, 0.0
        %v389 = vrot.slane %v387, 3
        %vm390 = vcmask 1040384
        %v391 = vsel %vm390, %v387, %v389
        %v393 = vadd.f32 %v381, %v391
        %v394 = vlaneseq
        %vm395 = vcmp.ge.s32.totalorder %v394, 0
        %vm396 = vcmp.lt.s32.totalorder %v394, 256
        %vm397 = vmand %vm395, %vm396
        %398 = vst.msk [vmem:[#allocation2] sm:$0x3] %vm397, %v393
        %v399 = vld [vmem:[#allocation3] sm:$0x3]
        %v400 = vsel %vm363, 1, 0
        %v401 = vcvt.s32.f32 %v400
        %v403 = vrot.slane %v401, 3
        %v404 = vsel %vm390, %v401, %v403
        %v406 = vadd.f32 %v399, %v404
        %407 = vst.msk [vmem:[#allocation3] sm:$0x3] %vm397, %v406
        // Predicated region
        $region49: #{tpu_custom_call.1} parent=31 // pred_check
          %p408 = pneg %p326
        $region50: #{tpu_custom_call.1} parent=31 // pred_check_branch
          %410 = sbr.rel (%p408) target = $region52
        $region51: #{tpu_custom_call.1} parent=31 // pred_region
          %v411 = vld [vmem:[#allocation2] sm:$0x3]
          %v413 = vperm.slane %v411, 0
          %v414 = vperm.slane %v411, 1
          %v417 = vsel %vm390, %v413, 0.0
          %v418 = vsel %vm390, %v414, 0.0
          %v419 = vadd.f32 %v417, %v418
          %420 = vadd.xlane.f32.xlu0 %v419
          %v421 = vpop.xlane.xlu0 %420
          %v422 = vrot.slane %v421, 4
          %v423 = vadd.f32 %v421, %v422
          %v424 = vrot.slane %v423, 2
          %v425 = vadd.f32 %v423, %v424
          %v426 = vrot.slane %v425, 1
          %v427 = vadd.f32 %v425, %v426
          %s428 = vtos %v427
          %v429 = vstv %s428
          %vm430 = vcmask 0
          %431 = vst.msk [vmem:[%s322] sm:$0x1] %vm430, %v429
          %v432 = vld [vmem:[#allocation3] sm:$0x3]
          %v434 = vperm.slane %v432, 0
          %v435 = vperm.slane %v432, 1
          %v438 = vsel %vm390, %v434, 0.0
          %v439 = vsel %vm390, %v435, 0.0
          %v440 = vadd.f32 %v438, %v439
          %441 = vadd.xlane.f32.xlu0 %v440
          %v442 = vpop.xlane.xlu0 %441
          %v443 = vrot.slane %v442, 4
          %v444 = vadd.f32 %v442, %v443
          %v445 = vrot.slane %v444, 2
          %v446 = vadd.f32 %v444, %v445
          %v447 = vrot.slane %v446, 1
          %v448 = vadd.f32 %v446, %v447
          %s449 = vtos %v448
          %v450 = vstv %s449
          %451 = vst.msk [vmem:[%s325] sm:$0x1] %vm430, %v450
        $region52: #{tpu_custom_call.1} parent=31 // pred_fallthru
          _
        %p452 = scmp.lt.s32.totalorder %s26, 1
        %s453 = scalar_select %p452, %s26, 1
        %s454 = scalar_lea.vmem %s3, %s453
        %p455 = scmp.lt.s32.totalorder %s26, 1
        %s456 = scalar_select %p455, %s26, 1
        %s457 = scalar_lea.vmem %s4, %s456
        // Predicated region
        $region53: #{tpu_custom_call.1} parent=31 // pred_check
          %p458 = pneg %p136
        $region54: #{tpu_custom_call.1} parent=31 // pred_check_branch
          %460 = sbr.rel (%p458) target = $region56
        $region55: #{tpu_custom_call.1} parent=31 // pred_region
          _
        $region56: #{tpu_custom_call.1} parent=31 // pred_fallthru
          _
        // Predicated region
        $region57: #{tpu_custom_call.1} parent=31 // pred_check
          %p461 = pneg %p162
        $region58: #{tpu_custom_call.1} parent=31 // pred_check_branch
          %463 = sbr.rel (%p461) target = $region60
        $region59: #{tpu_custom_call.1} parent=31 // pred_region
          _
        $region60: #{tpu_custom_call.1} parent=31 // pred_fallthru
          _
      $region32: #{tpu_custom_call.1} parent=5 // pred_fallthru
        _
      %p464 = scmp.le.s32.totalorder 2, %s17
      // Predicated region
      $region61: #{tpu_custom_call.1} parent=5 // pred_check
        %p465 = pneg %p464
      $region62: #{tpu_custom_call.1} parent=5 // pred_check_branch
        %467 = sbr.rel (%p465) target = $region64
      $region63: #{tpu_custom_call.1} parent=5 // pred_region
        %s468 = ssub.s32 %s17, 2
        // Predicated region
        $region65: #{tpu_custom_call.1} parent=63 // pred_check
          %p469 = pneg %p142
        $region66: #{tpu_custom_call.1} parent=63 // pred_check_branch
          %471 = sbr.rel (%p469) target = $region68
        $region67: #{tpu_custom_call.1} parent=63 // pred_region
          %p472 = scmp.lt.s32.totalorder %s28, 1
          %s473 = scalar_select %p472, %s28, 1
          %s474 = scalar_lea.vmem %s3, %s473
        $region68: #{tpu_custom_call.1} parent=63 // pred_fallthru
          _
        // Predicated region
        $region69: #{tpu_custom_call.1} parent=63 // pred_check
          %p475 = pneg %p168
        $region70: #{tpu_custom_call.1} parent=63 // pred_check_branch
          %477 = sbr.rel (%p475) target = $region72
        $region71: #{tpu_custom_call.1} parent=63 // pred_region
          %p478 = scmp.lt.s32.totalorder %s28, 1
          %s479 = scalar_select %p478, %s28, 1
          %s480 = scalar_lea.vmem %s4, %s479
        $region72: #{tpu_custom_call.1} parent=63 // pred_fallthru
          _
      $region64: #{tpu_custom_call.1} parent=5 // pred_fallthru
        _
    $region6: #{tpu_custom_call.1} parent=1 // loop_footer
      %s21 = sadd.s32 1, %s17
    $region7: #{tpu_custom_call.1} parent=1 // loop_footer_branch
      %16 = sbr.rel target = $region3
    $region8: #{tpu_custom_call.1} parent=1 // loop_exit
      _
    %481 = vsyncpa [#allocation5], 1
    %s482 = scalar_lea.sflag [#allocation5], 1
    %483 = vsyncpa %s482, 1
    %484 = vsyncpa [#allocation7], 1
    %s485 = scalar_lea.sflag [#allocation7], 1
    %486 = vsyncpa %s485, 1

</llo_original>
